<compile_context>
chip_gen: v7x
topology: tpu7x:2x2x1
jax: 0.10.0
libtpu: 0.0.40
codegen_flags: <defaults>
</compile_context>

<pallas_src>
import functools

import jax
import jax.numpy as jnp
from jax.experimental import pallas as pl
from jax.experimental.pallas import tpu as pltpu


# ---------------------------------------------------------------------------
# helpers
# ---------------------------------------------------------------------------
def _round_up(x, m):
    return ((x + m - 1) // m) * m


def _pick_tile(dim, pref):
    # dim is a multiple of 128; return the largest multiple of 128 <= pref
    # that divides dim.
    t = min(pref, dim)
    while dim % t:
        t -= 128
    return t


def _vmem_limit_bytes():
    # Per-generation scoped-VMEM budget: ~96 MiB on v5e/v6e (128 MiB phys),
    # ~48 MiB on v7x (64 MiB phys).  Conservative fallback if query fails.
    try:
        cap = pltpu.get_tpu_info().vmem_capacity_bytes
        return int(min(cap * 3 // 4, 96 * 1024 * 1024))
    except Exception:
        return 48 * 1024 * 1024


# ---------------------------------------------------------------------------
# kernels
# ---------------------------------------------------------------------------
def _mlp_kernel(feats_ref, w1_ref, b1_ref, w2_ref, b2_ref, h0_ref):
    # h0 = relu(x @ W1 + b1) @ W2 + b2   (one row tile per grid step)
    x = feats_ref[...]
    h = jnp.dot(x, w1_ref[...], preferred_element_type=jnp.float32) + b1_ref[...]
    h = jnp.maximum(h, 0.0)
    h0_ref[...] = (jnp.dot(h, w2_ref[...], preferred_element_type=jnp.float32)
                   + b2_ref[...]).astype(h0_ref.dtype)


def _prop_fused_kernel(ahat_ref, h0_ref, h_ref, *, alpha):
    # All k APPNP steps in one call.  grid=(k,) "arbitrary"; every block uses
    # a constant index map, so bf16 a_hat and h0 are DMA'd exactly once and h
    # stays VMEM-resident across all steps (one HBM writeback at the end).
    step = pl.program_id(0)
    h0 = h0_ref[...]

    @pl.when(step == 0)
    def _():
        h_ref[...] = h0

    prev = h_ref[...]
    prop = jnp.dot(ahat_ref[...], prev.astype(jnp.bfloat16),
                   preferred_element_type=jnp.float32)
    h_ref[...] = (1.0 - alpha) * prop + alpha * h0


def _prop_tiled_kernel(ahat_ref, h_ref, h0_ref, out_ref, *, alpha, tc):
    # One APPNP step for graphs too large for the fused path:
    #   out = (1-alpha) * (a_hat @ h) + alpha * h0
    # grid = (row tiles [parallel], col tiles [arbitrary, reduction]).
    # a_hat streams as bf16 tiles; the full (n_p, out_p) h is VMEM-resident
    # (constant index map) and sliced per reduction step; out_ref (f32) is the
    # accumulator directly (no scratch), blend hoisted to the finalize branch.
    j = pl.program_id(1)

    @pl.when(j == 0)
    def _():
        out_ref[...] = jnp.zeros_like(out_ref)

    off = pl.multiple_of(j * tc, 128)
    h_blk = h_ref[pl.ds(off, tc), :].astype(jnp.bfloat16)
    out_ref[...] += jnp.dot(ahat_ref[...], h_blk,
                            preferred_element_type=jnp.float32)

    @pl.when(j == pl.num_programs(1) - 1)
    def _():
        out_ref[...] = ((1.0 - alpha) * out_ref[...]
                        + alpha * h0_ref[...]).astype(out_ref.dtype)


# ---------------------------------------------------------------------------
# forward (padded, jitted)
# ---------------------------------------------------------------------------
def _appnp_forward_padded(feats, a_hat, w1, b1, w2, b2, *, alpha, k):
    n, in_dim = feats.shape
    hid_dim = w1.shape[1]
    out_dim = w2.shape[1]
    f32 = jnp.float32
    bf16 = jnp.bfloat16

    vmem_limit = _vmem_limit_bytes()

    in_p = _round_up(in_dim, 128)
    hid_p = _round_up(hid_dim, 128)
    out_p = _round_up(out_dim, 128)

    n_p = _round_up(n, 128)
    ahat_bytes = 2 * n_p * n_p          # bf16
    h_bytes = 4 * n_p * out_p           # f32
    # generous budget: double-buffered a_hat + (h, h0, out, slack) f32 blocks
    use_fused = (2 * ahat_bytes + 4 * h_bytes) <= int(0.75 * vmem_limit)
    if not use_fused:
        # pad to the intended tile so tiles never degrade below 512
        n_p = _round_up(n, 512)

    # ---- zero-pad to lane-dense shapes ----
    # Padded ROWS of h0 are generally non-zero (relu(b1) @ W2 + b2), but padded
    # COLUMNS of a_hat are zero, so real rows are never contaminated; the
    # wrapper slices the result back to (n, out_dim).
    feats_p = jnp.zeros((n_p, in_p), f32).at[:n, :in_dim].set(feats)
    ahat_p = jnp.zeros((n_p, n_p), bf16).at[:n, :n].set(a_hat.astype(bf16))
    w1_p = jnp.zeros((in_p, hid_p), f32).at[:in_dim, :hid_dim].set(w1)
    b1_p = jnp.zeros((1, hid_p), f32).at[:, :hid_dim].set(jnp.reshape(b1, (1, -1)))
    w2_p = jnp.zeros((hid_p, out_p), f32).at[:hid_dim, :out_dim].set(w2)
    b2_p = jnp.zeros((1, out_p), f32).at[:, :out_dim].set(jnp.reshape(b2, (1, -1)))

    # ---------------- phase 1: MLP (row-tiled, megacore-parallel) ----------
    tm_mlp = _pick_tile(n_p, 512)
    mlp_cost = pl.CostEstimate(
        flops=2 * n_p * in_p * hid_p + 2 * n_p * hid_p * out_p,
        transcendentals=0,
        bytes_accessed=4 * (n_p * in_p + in_p * hid_p + hid_p * out_p
                            + n_p * out_p + hid_p + out_p),
    )
    h0 = pl.pallas_call(
        _mlp_kernel,
        out_shape=jax.ShapeDtypeStruct((n_p, out_p), f32),
        grid=(n_p // tm_mlp,),
        in_specs=[
            pl.BlockSpec((tm_mlp, in_p), lambda i: (i, 0)),
            pl.BlockSpec((in_p, hid_p), lambda i: (0, 0)),
            pl.BlockSpec((1, hid_p), lambda i: (0, 0)),
            pl.BlockSpec((hid_p, out_p), lambda i: (0, 0)),
            pl.BlockSpec((1, out_p), lambda i: (0, 0)),
        ],
        out_specs=pl.BlockSpec((tm_mlp, out_p), lambda i: (i, 0)),
        compiler_params=pltpu.CompilerParams(
            dimension_semantics=("parallel",),
            vmem_limit_bytes=vmem_limit),
        cost_estimate=mlp_cost,
    )(feats_p, w1_p, b1_p, w2_p, b2_p)

    # ---------------- phase 2: k power-iteration steps ---------------------
    if use_fused:
        # single call; a_hat read from HBM once total, h never round-trips.
        prop_cost = pl.CostEstimate(
            flops=k * (2 * n_p * n_p * out_p + 3 * n_p * out_p),
            transcendentals=0,
            bytes_accessed=2 * n_p * n_p + 4 * 2 * n_p * out_p,
        )
        h = pl.pallas_call(
            functools.partial(_prop_fused_kernel, alpha=float(alpha)),
            out_shape=jax.ShapeDtypeStruct((n_p, out_p), f32),
            grid=(k,),
            in_specs=[
                pl.BlockSpec((n_p, n_p), lambda s: (0, 0)),     # bf16 a_hat
                pl.BlockSpec((n_p, out_p), lambda s: (0, 0)),   # h0 (teleport)
            ],
            out_specs=pl.BlockSpec((n_p, out_p), lambda s: (0, 0)),
            compiler_params=pltpu.CompilerParams(
                dimension_semantics=("arbitrary",),
                vmem_limit_bytes=vmem_limit),
            cost_estimate=prop_cost,
        )(ahat_p, h0)
    else:
        tm = _pick_tile(n_p, 1024)
        tc = _pick_tile(n_p, 1024)
        prop_cost = pl.CostEstimate(
            flops=2 * n_p * n_p * out_p + 3 * n_p * out_p,
            transcendentals=0,
            bytes_accessed=2 * n_p * n_p + 4 * 3 * n_p * out_p,
        )
        prop_call = pl.pallas_call(
            functools.partial(_prop_tiled_kernel, alpha=float(alpha), tc=tc),
            out_shape=jax.ShapeDtypeStruct((n_p, out_p), f32),
            grid=(n_p // tm, n_p // tc),   # reduction (col) axis last
            in_specs=[
                pl.BlockSpec((tm, tc), lambda i, j: (i, j)),       # bf16 a_hat tile
                pl.BlockSpec((n_p, out_p), lambda i, j: (0, 0)),   # full h resident
                pl.BlockSpec((tm, out_p), lambda i, j: (i, 0)),    # h0 (teleport)
            ],
            out_specs=pl.BlockSpec((tm, out_p), lambda i, j: (i, 0)),
            compiler_params=pltpu.CompilerParams(
                dimension_semantics=("parallel", "arbitrary"),
                vmem_limit_bytes=vmem_limit),
            cost_estimate=prop_cost,
        )
        # NOTE: no input_output_aliases here on purpose — later row tiles read
        # h column blocks that earlier tiles would already have overwritten.
        h = h0
        for _ in range(k):
            h = prop_call(ahat_p, h, h0)

    return h[:n, :out_dim]


_appnp_forward_jit = jax.jit(_appnp_forward_padded, static_argnames=("alpha", "k"))


def appnp_forward(feats, a_hat, w1, b1, w2, b2, *, alpha=0.1, k=10):
    h = _appnp_forward_jit(feats, a_hat, w1, b1, w2, b2,
                           alpha=float(alpha), k=int(k))
    return ([h], h)  # mirrors the PyTorch module's (h_list, h) return


# ---------------------------------------------------------------------------
# deterministic test data
# ---------------------------------------------------------------------------
def _linear_init(key, fan_in, fan_out):
    # stand-in for nn.Linear.reset_parameters (uniform +-1/sqrt(fan_in))
    kw, kb = jax.random.split(key)
    bound = 1.0 / jnp.sqrt(fan_in)
    w = jax.random.uniform(kw, (fan_in, fan_out), jnp.float32, -bound, bound)
    b = jax.random.uniform(kb, (1, fan_out), jnp.float32, -bound, bound)
    return w, b


def _make_norm_adj(key, n):
    # random symmetric 0/1 graph with self-loops, DGL-style sym normalization
    upper = (jax.random.uniform(key, (n, n)) < 0.3).astype(jnp.float32)
    adj = jnp.triu(upper, 1)
    adj = adj + adj.T + jnp.eye(n, dtype=jnp.float32)
    deg = jnp.maximum(adj.sum(axis=1), 1.0)
    d_inv_sqrt = 1.0 / jnp.sqrt(deg)
    return adj * d_inv_sqrt[:, None] * d_inv_sqrt[None, :]


if __name__ == "__main__":
    # small shapes: N=16 nodes, input_dim=32, hidden_dim=32, output_dim=16
    N, IN_DIM, HID_DIM, OUT_DIM = 16, 32, 32, 16
    ALPHA, K = 0.1, 10

    key = jax.random.PRNGKey(0)
    k_feat, k_adj, k_l1, k_l2 = jax.random.split(key, 4)

    feats = jax.random.normal(k_feat, (N, IN_DIM), jnp.float32)
    a_hat = _make_norm_adj(k_adj, N)
    w1, b1 = _linear_init(k_l1, IN_DIM, HID_DIM)
    w2, b2 = _linear_init(k_l2, HID_DIM, OUT_DIM)

    (h_list, h) = appnp_forward(feats, a_hat, w1, b1, w2, b2, alpha=ALPHA, k=K)
    jax.block_until_ready(h)

    # reference check in plain JAX (f32); kernel uses a bf16 a_hat / bf16 MXU
    # feed with f32 accumulation, so the tolerance is loosened accordingly.
    ref = jnp.maximum(feats @ w1 + b1, 0.0) @ w2 + b2
    ref0 = ref
    for _ in range(K):
        ref = (1.0 - ALPHA) * (a_hat @ ref) + ALPHA * ref0
    assert h.shape == (N, OUT_DIM)
    assert jnp.allclose(h, ref, atol=3e-2, rtol=3e-2), float(jnp.max(jnp.abs(h - ref)))

    print("KERNEL_OK")
</pallas_src>

<mosaic_0001>
module attributes {stable_mosaic.version = 11 : i64} {
  func.func @_mlp_kernel(%arg0: i32, %arg1: memref<128x128xf32, #tpu.memory_space<vmem>>, %arg2: memref<128x128xf32, #tpu.memory_space<vmem>>, %arg3: memref<1x128xf32, #tpu.memory_space<vmem>>, %arg4: memref<128x128xf32, #tpu.memory_space<vmem>>, %arg5: memref<1x128xf32, #tpu.memory_space<vmem>>, %arg6: memref<128x128xf32, #tpu.memory_space<vmem>>) attributes {dimension_semantics = [#tpu.dimension_semantics<parallel>], iteration_bounds = array<i64: 1>, scalar_prefetch = 0 : i64, scratch_operands = 0 : i64, tpu.core_type = #tpu.core_type<tc>, window_params = [{transform_indices = @transform_0, window_bounds = array<i64: 128, 128>}, {pipeline_mode = #tpu.pipeline_mode<synchronous>, transform_indices = @transform_1, window_bounds = array<i64: 128, 128>}, {pipeline_mode = #tpu.pipeline_mode<synchronous>, transform_indices = @transform_2, window_bounds = array<i64: 1, 128>}, {pipeline_mode = #tpu.pipeline_mode<synchronous>, transform_indices = @transform_3, window_bounds = array<i64: 128, 128>}, {pipeline_mode = #tpu.pipeline_mode<synchronous>, transform_indices = @transform_4, window_bounds = array<i64: 1, 128>}, {transform_indices = @transform_5, window_bounds = array<i64: 128, 128>}]} {
    %c0 = arith.constant 0 : index
    %c0_0 = arith.constant 0 : index
    %0 = vector.load %arg1[%c0, %c0_0] : memref<128x128xf32, #tpu.memory_space<vmem>>, vector<128x128xf32>
    %c0_1 = arith.constant 0 : index
    %c0_2 = arith.constant 0 : index
    %1 = vector.load %arg2[%c0_1, %c0_2] : memref<128x128xf32, #tpu.memory_space<vmem>>, vector<128x128xf32>
    %cst = arith.constant dense<0.000000e+00> : vector<128x128xf32>
    %2 = tpu.matmul %0, %1, %cst {dimension_numbers = #tpu.dot_dimension_numbers<[1], [0], [0], [1], [0, 0, 1, 1], [], []>} : vector<128x128xf32>, vector<128x128xf32>, vector<128x128xf32> -> vector<128x128xf32>
    %c0_3 = arith.constant 0 : index
    %c0_4 = arith.constant 0 : index
    %3 = vector.load %arg3[%c0_3, %c0_4] : memref<1x128xf32, #tpu.memory_space<vmem>>, vector<1x128xf32>
    %4 = vector.broadcast %3 : vector<1x128xf32> to vector<128x128xf32>
    %5 = arith.addf %2, %4 : vector<128x128xf32>
    %cst_5 = arith.constant 0.000000e+00 : f32
    %6 = vector.broadcast %cst_5 : f32 to vector<128x128xf32>
    %7 = arith.maximumf %5, %6 : vector<128x128xf32>
    %c0_6 = arith.constant 0 : index
    %c0_7 = arith.constant 0 : index
    %8 = vector.load %arg4[%c0_6, %c0_7] : memref<128x128xf32, #tpu.memory_space<vmem>>, vector<128x128xf32>
    %cst_8 = arith.constant dense<0.000000e+00> : vector<128x128xf32>
    %9 = tpu.matmul %7, %8, %cst_8 {dimension_numbers = #tpu.dot_dimension_numbers<[1], [0], [0], [1], [0, 0, 1, 1], [], []>} : vector<128x128xf32>, vector<128x128xf32>, vector<128x128xf32> -> vector<128x128xf32>
    %c0_9 = arith.constant 0 : index
    %c0_10 = arith.constant 0 : index
    %10 = vector.load %arg5[%c0_9, %c0_10] : memref<1x128xf32, #tpu.memory_space<vmem>>, vector<1x128xf32>
    %11 = vector.broadcast %10 : vector<1x128xf32> to vector<128x128xf32>
    %12 = arith.addf %9, %11 : vector<128x128xf32>
    %c0_11 = arith.constant 0 : index
    %c0_12 = arith.constant 0 : index
    %13 = vector.load %arg6[%c0_11, %c0_12] : memref<128x128xf32, #tpu.memory_space<vmem>>, vector<128x128xf32>
    tpu.vector_store %arg6[%c0_11, %c0_12], %12 {strides = array<i32>} : memref<128x128xf32, #tpu.memory_space<vmem>>, vector<128x128xf32>,
    return
  }
  func.func @transform_0(%arg0: i32) -> (i32, i32) {
    %c0_i32 = arith.constant 0 : i32
    %c0_i32_0 = arith.constant 0 : i32
    return %arg0, %c0_i32 : i32, i32
  }
  func.func @transform_1(%arg0: i32) -> (i32, i32) {
    %c0_i32 = arith.constant 0 : i32
    %c0_i32_0 = arith.constant 0 : i32
    %c0_i32_1 = arith.constant 0 : i32
    return %c0_i32, %c0_i32_0 : i32, i32
  }
  func.func @transform_2(%arg0: i32) -> (i32, i32) {
    %c0_i32 = arith.constant 0 : i32
    %c0_i32_0 = arith.constant 0 : i32
    %c0_i32_1 = arith.constant 0 : i32
    return %c0_i32, %c0_i32_0 : i32, i32
  }
  func.func @transform_3(%arg0: i32) -> (i32, i32) {
    %c0_i32 = arith.constant 0 : i32
    %c0_i32_0 = arith.constant 0 : i32
    %c0_i32_1 = arith.constant 0 : i32
    return %c0_i32, %c0_i32_0 : i32, i32
  }
  func.func @transform_4(%arg0: i32) -> (i32, i32) {
    %c0_i32 = arith.constant 0 : i32
    %c0_i32_0 = arith.constant 0 : i32
    %c0_i32_1 = arith.constant 0 : i32
    return %c0_i32, %c0_i32_0 : i32, i32
  }
  func.func @transform_5(%arg0: i32) -> (i32, i32) {
    %c0_i32 = arith.constant 0 : i32
    %c0_i32_0 = arith.constant 0 : i32
    return %arg0, %c0_i32 : i32, i32
  }
}

module attributes {stable_mosaic.version = 11 : i64} {
  func.func @_prop_fused_kernel(%arg0: i32, %arg1: memref<128x128xbf16, #tpu.memory_space<vmem>>, %arg2: memref<128x128xf32, #tpu.memory_space<vmem>>, %arg3: memref<128x128xf32, #tpu.memory_space<vmem>>) attributes {dimension_semantics = [#tpu.dimension_semantics<arbitrary>], iteration_bounds = array<i64: 10>, scalar_prefetch = 0 : i64, scratch_operands = 0 : i64, tpu.core_type = #tpu.core_type<tc>, window_params = [{pipeline_mode = #tpu.pipeline_mode<synchronous>, transform_indices = @transform_0, window_bounds = array<i64: 128, 128>}, {pipeline_mode = #tpu.pipeline_mode<synchronous>, transform_indices = @transform_1, window_bounds = array<i64: 128, 128>}, {pipeline_mode = #tpu.pipeline_mode<synchronous>, transform_indices = @transform_2, window_bounds = array<i64: 128, 128>}]} {
    %c0 = arith.constant 0 : index
    %c0_0 = arith.constant 0 : index
    %0 = vector.load %arg2[%c0, %c0_0] : memref<128x128xf32, #tpu.memory_space<vmem>>, vector<128x128xf32>
    %c0_i32 = arith.constant 0 : i32
    %1 = arith.cmpi eq, %arg0, %c0_i32 : i32
    %2 = arith.extui %1 : i1 to i32
    %c0_i32_1 = arith.constant 0 : i32
    %3 = arith.cmpi ne, %2, %c0_i32_1 : i32
    scf.if %3 {
      %c0_10 = arith.constant 0 : index
      %c0_11 = arith.constant 0 : index
      %14 = vector.load %arg3[%c0_10, %c0_11] : memref<128x128xf32, #tpu.memory_space<vmem>>, vector<128x128xf32>
      tpu.vector_store %arg3[%c0_10, %c0_11], %0 {strides = array<i32>} : memref<128x128xf32, #tpu.memory_space<vmem>>, vector<128x128xf32>,
    } else {
    }
    %c0_2 = arith.constant 0 : index
    %c0_3 = arith.constant 0 : index
    %4 = vector.load %arg3[%c0_2, %c0_3] : memref<128x128xf32, #tpu.memory_space<vmem>>, vector<128x128xf32>
    %c0_4 = arith.constant 0 : index
    %c0_5 = arith.constant 0 : index
    %5 = vector.load %arg1[%c0_4, %c0_5] : memref<128x128xbf16, #tpu.memory_space<vmem>>, vector<128x128xbf16>
    %6 = arith.truncf %4 : vector<128x128xf32> to vector<128x128xbf16>
    %cst = arith.constant dense<0.000000e+00> : vector<128x128xf32>
    %7 = tpu.matmul %5, %6, %cst {dimension_numbers = #tpu.dot_dimension_numbers<[1], [0], [0], [1], [0, 0, 1, 1], [], []>} : vector<128x128xbf16>, vector<128x128xbf16>, vector<128x128xf32> -> vector<128x128xf32>
    %cst_6 = arith.constant 0.899999976 : f32
    %8 = vector.broadcast %cst_6 : f32 to vector<128x128xf32>
    %9 = arith.mulf %8, %7 : vector<128x128xf32>
    %cst_7 = arith.constant 1.000000e-01 : f32
    %10 = vector.broadcast %cst_7 : f32 to vector<128x128xf32>
    %11 = arith.mulf %10, %0 : vector<128x128xf32>
    %12 = arith.addf %9, %11 : vector<128x128xf32>
    %c0_8 = arith.constant 0 : index
    %c0_9 = arith.constant 0 : index
    %13 = vector.load %arg3[%c0_8, %c0_9] : memref<128x128xf32, #tpu.memory_space<vmem>>, vector<128x128xf32>
    tpu.vector_store %arg3[%c0_8, %c0_9], %12 {strides = array<i32>} : memref<128x128xf32, #tpu.memory_space<vmem>>, vector<128x128xf32>,
    return
  }
  func.func @transform_0(%arg0: i32) -> (i32, i32) {
    %c0_i32 = arith.constant 0 : i32
    %c0_i32_0 = arith.constant 0 : i32
    %c0_i32_1 = arith.constant 0 : i32
    return %c0_i32, %c0_i32_0 : i32, i32
  }
  func.func @transform_1(%arg0: i32) -> (i32, i32) {
    %c0_i32 = arith.constant 0 : i32
    %c0_i32_0 = arith.constant 0 : i32
    %c0_i32_1 = arith.constant 0 : i32
    return %c0_i32, %c0_i32_0 : i32, i32
  }
  func.func @transform_2(%arg0: i32) -> (i32, i32) {
    %c0_i32 = arith.constant 0 : i32
    %c0_i32_0 = arith.constant 0 : i32
    %c0_i32_1 = arith.constant 0 : i32
    return %c0_i32, %c0_i32_0 : i32, i32
  }
}

</mosaic_0001>

<llo_original>
// kernel: _appnp_forward_padded.2
$region0: #{_appnp_forward_padded.2}
  #allocation0 [shape = 'u32[]', space=smem, size = 0x4, offset = 0x4, fixed_abs, tag = 'smem constant byte address 0x4 - core index']
  #allocation1 [shape = 'u32[144,128]{1,0:T(1,128)}', space=vmem, size = 0x12000, scoped, tag = 'internal scratch']
  %s0 = inlined_call_operand.vmem [shape: f32[128,128], index: 0, kind: input, shape index: {}]
  %s1 = inlined_call_operand.vmem [shape: f32[128,128], index: 1, kind: input, shape index: {}]
  %s2 = inlined_call_operand.vmem [shape: f32[1,128], index: 2, kind: input, shape index: {}]
  %s3 = inlined_call_operand.vmem [shape: f32[128,128], index: 3, kind: input, shape index: {}]
  %s4 = inlined_call_operand.vmem [shape: f32[1,128], index: 4, kind: input, shape index: {}]
  %s5 = inlined_call_operand.vmem [shape: f32[128,128], index: 5, kind: output, shape index: {}]
  %s6 = sld [smem:[#allocation0]]
  $region30: #{_appnp_forward_padded.2} parent=0
    _
  %s8 = ssub.s32 1, %s6
  %s9 = scalar_select 0, %s8, %s6
  // Predicated region
  $region2: #{_appnp_forward_padded.2} parent=0 // pred_check
    _
  $region3: #{_appnp_forward_padded.2} parent=0 // pred_check_branch
    %11 = sbr.rel (0) target = $region5
  $region4: #{_appnp_forward_padded.2} parent=0 // pred_region
    _
  $region5: #{_appnp_forward_padded.2} parent=0 // pred_fallthru
    _
  // Predicated region
  $region6: #{_appnp_forward_padded.2} parent=0 // pred_check
    _
  $region7: #{_appnp_forward_padded.2} parent=0 // pred_check_branch
    %13 = sbr.rel (0) target = $region9
  $region8: #{_appnp_forward_padded.2} parent=0 // pred_region
    _
  $region9: #{_appnp_forward_padded.2} parent=0 // pred_fallthru
    _
  // Predicated region
  $region10: #{_appnp_forward_padded.2} parent=0 // pred_check
    _
  $region11: #{_appnp_forward_padded.2} parent=0 // pred_check_branch
    %15 = sbr.rel (0) target = $region13
  $region12: #{_appnp_forward_padded.2} parent=0 // pred_region
    _
  $region13: #{_appnp_forward_padded.2} parent=0 // pred_fallthru
    _
  // Predicated region
  $region14: #{_appnp_forward_padded.2} parent=0 // pred_check
    _
  $region15: #{_appnp_forward_padded.2} parent=0 // pred_check_branch
    %17 = sbr.rel (0) target = $region17
  $region16: #{_appnp_forward_padded.2} parent=0 // pred_region
    _
  $region17: #{_appnp_forward_padded.2} parent=0 // pred_fallthru
    _
  // Predicated region
  $region18: #{_appnp_forward_padded.2} parent=0 // pred_check
    _
  $region19: #{_appnp_forward_padded.2} parent=0 // pred_check_branch
    %19 = sbr.rel (0) target = $region21
  $region20: #{_appnp_forward_padded.2} parent=0 // pred_region
    _
  $region21: #{_appnp_forward_padded.2} parent=0 // pred_fallthru
    _
  %v20 = vld [vmem:[%s0] sm:$0xff]
  %v21 = vld [vmem:[%s0 + $0x8] sm:$0xff]
  %v22 = vld [vmem:[%s0 + $0x10] sm:$0xff]
  %v23 = vld [vmem:[%s0 + $0x18] sm:$0xff]
  %v24 = vld [vmem:[%s0 + $0x20] sm:$0xff]
  %v25 = vld [vmem:[%s0 + $0x28] sm:$0xff]
  %v26 = vld [vmem:[%s0 + $0x30] sm:$0xff]
  %v27 = vld [vmem:[%s0 + $0x38] sm:$0xff]
  %v28 = vld [vmem:[%s0 + $0x40] sm:$0xff]
  %v29 = vld [vmem:[%s0 + $0x48] sm:$0xff]
  %v30 = vld [vmem:[%s0 + $0x50] sm:$0xff]
  %v31 = vld [vmem:[%s0 + $0x58] sm:$0xff]
  %v32 = vld [vmem:[%s0 + $0x60] sm:$0xff]
  %v33 = vld [vmem:[%s0 + $0x68] sm:$0xff]
  %v34 = vld [vmem:[%s0 + $0x70] sm:$0xff]
  %v35 = vld [vmem:[%s0 + $0x78] sm:$0xff]
  %v36 = vld [vmem:[%s1] sm:$0xff]
  %v37 = vld [vmem:[%s1 + $0x8] sm:$0xff]
  %v38 = vld [vmem:[%s1 + $0x10] sm:$0xff]
  %v39 = vld [vmem:[%s1 + $0x18] sm:$0xff]
  %v40 = vld [vmem:[%s1 + $0x20] sm:$0xff]
  %v41 = vld [vmem:[%s1 + $0x28] sm:$0xff]
  %v42 = vld [vmem:[%s1 + $0x30] sm:$0xff]
  %v43 = vld [vmem:[%s1 + $0x38] sm:$0xff]
  %v44 = vld [vmem:[%s1 + $0x40] sm:$0xff]
  %v45 = vld [vmem:[%s1 + $0x48] sm:$0xff]
  %v46 = vld [vmem:[%s1 + $0x50] sm:$0xff]
  %v47 = vld [vmem:[%s1 + $0x58] sm:$0xff]
  %v48 = vld [vmem:[%s1 + $0x60] sm:$0xff]
  %v49 = vld [vmem:[%s1 + $0x68] sm:$0xff]
  %v50 = vld [vmem:[%s1 + $0x70] sm:$0xff]
  %v51 = vld [vmem:[%s1 + $0x78] sm:$0xff]
  %v52 = vld [vmem:[%s2] sm:$0x1]
  %v54 = vlaneseq
  %v55 = vshrl.u32 %v54, 7
  %v56 = vsub.s32 0, %v55
  %v57 = vrot.slane %v52, %v56
  %59 = vmatprep.subr.mxu0 0.0
  %60 = vmatpush1.msra.mxu0 %v36
  %61 = vmatprep.subr.mxu0 0.0
  %62 = vmatpush1.msra.mxu0 %v37
  %63 = vmatprep.subr.mxu0 0.0
  %64 = vmatpush1.msra.mxu0 %v38
  %65 = vmatprep.subr.mxu0 0.0
  %66 = vmatpush1.msra.mxu0 %v39
  %67 = vmatprep.subr.mxu0 0.0
  %68 = vmatpush1.msra.mxu0 %v40
  %69 = vmatprep.subr.mxu0 0.0
  %70 = vmatpush1.msra.mxu0 %v41
  %71 = vmatprep.subr.mxu0 0.0
  %72 = vmatpush1.msra.mxu0 %v42
  %73 = vmatprep.subr.mxu0 0.0
  %74 = vmatpush1.msra.mxu0 %v43
  %75 = vmatprep.subr.mxu0 0.0
  %76 = vmatpush1.msra.mxu0 %v44
  %77 = vmatprep.subr.mxu0 0.0
  %78 = vmatpush1.msra.mxu0 %v45
  %79 = vmatprep.subr.mxu0 0.0
  %80 = vmatpush1.msra.mxu0 %v46
  %81 = vmatprep.subr.mxu0 0.0
  %82 = vmatpush1.msra.mxu0 %v47
  %83 = vmatprep.subr.mxu0 0.0
  %84 = vmatpush1.msra.mxu0 %v48
  %85 = vmatprep.subr.mxu0 0.0
  %86 = vmatpush1.msra.mxu0 %v49
  %87 = vmatprep.subr.mxu0 0.0
  %88 = vmatpush1.msra.mxu0 %v50
  %89 = vmatprep.subr.mxu0 0.0
  %90 = vmatpush1.msra.mxu0 %v51
  %91 = vmatprep.subr.mxu0 0.0
  %92 = vmatpush1.msra.mxu0 0.0
  %93 = vmatprep.subr.mxu0 0.0
  %94 = vmatpush1.msra.mxu0 0.0
  %95 = vmatprep.subr.mxu0 0.0
  %96 = vmatpush1.msra.mxu0 0.0
  %97 = vmatprep.subr.mxu0 0.0
  %98 = vmatpush1.msra.mxu0 0.0
  %99 = vmatprep.subr.mxu0 0.0
  %100 = vmatpush1.msra.mxu0 0.0
  %101 = vmatprep.subr.mxu0 0.0
  %102 = vmatpush1.msra.mxu0 0.0
  %103 = vmatprep.subr.mxu0 0.0
  %104 = vmatpush1.msra.mxu0 0.0
  %105 = vmatprep.subr.mxu0 0.0
  %106 = vmatpush1.msra.mxu0 0.0
  %107 = vmatprep.subr.mxu0 0.0
  %108 = vmatpush1.msra.mxu0 0.0
  %109 = vmatprep.subr.mxu0 0.0
  %110 = vmatpush1.msra.mxu0 0.0
  %111 = vmatprep.subr.mxu0 0.0
  %112 = vmatpush1.msra.mxu0 0.0
  %113 = vmatprep.subr.mxu0 0.0
  %114 = vmatpush1.msra.mxu0 0.0
  %115 = vmatprep.subr.mxu0 0.0
  %116 = vmatpush1.msra.mxu0 0.0
  %117 = vmatprep.subr.mxu0 0.0
  %118 = vmatpush1.msra.mxu0 0.0
  %119 = vmatprep.subr.mxu0 0.0
  %120 = vmatpush1.msra.mxu0 0.0
  %121 = vmatprep.subr.mxu0 0.0
  %122 = vmatpush1.msra.mxu0 0.0
  %123 = vmatprep.mubr.f32.mxu0 0.0
  %124 = vmatmul.mubr.f32.gmra.mrb[0].mxu0 %v20
  %v125 = vpop.f32.mrb[0].mxu0
  %v126 = vadd.f32 %v57, %v125
  %v127 = vpop.f32.mrb[0].mxu0
  %128 = vmatprep.mubr.f32.mxu0 0.0
  %129 = vmatmul.mubr.f32.gmra.mrb[0].mxu0 %v21
  %v130 = vpop.f32.mrb[0].mxu0
  %v131 = vadd.f32 %v57, %v130
  %v132 = vpop.f32.mrb[0].mxu0
  %133 = vmatprep.mubr.f32.mxu0 0.0
  %134 = vmatmul.mubr.f32.gmra.mrb[0].mxu0 %v22
  %v135 = vpop.f32.mrb[0].mxu0
  %v136 = vadd.f32 %v57, %v135
  %v137 = vpop.f32.mrb[0].mxu0
  %138 = vmatprep.mubr.f32.mxu0 0.0
  %139 = vmatmul.mubr.f32.gmra.mrb[0].mxu0 %v23
  %v140 = vpop.f32.mrb[0].mxu0
  %v141 = vadd.f32 %v57, %v140
  %v142 = vpop.f32.mrb[0].mxu0
  %143 = vmatprep.mubr.f32.mxu0 0.0
  %144 = vmatmul.mubr.f32.gmra.mrb[0].mxu0 %v24
  %v145 = vpop.f32.mrb[0].mxu0
  %v146 = vadd.f32 %v57, %v145
  %v147 = vpop.f32.mrb[0].mxu0
  %148 = vmatprep.mubr.f32.mxu0 0.0
  %149 = vmatmul.mubr.f32.gmra.mrb[0].mxu0 %v25
  %v150 = vpop.f32.mrb[0].mxu0
  %v151 = vadd.f32 %v57, %v150
  %v152 = vpop.f32.mrb[0].mxu0
  %153 = vmatprep.mubr.f32.mxu0 0.0
  %154 = vmatmul.mubr.f32.gmra.mrb[0].mxu0 %v26
  %v155 = vpop.f32.mrb[0].mxu0
  %v156 = vadd.f32 %v57, %v155
  %v157 = vpop.f32.mrb[0].mxu0
  %158 = vmatprep.mubr.f32.mxu0 0.0
  %159 = vmatmul.mubr.f32.gmra.mrb[0].mxu0 %v27
  %v160 = vpop.f32.mrb[0].mxu0
  %v161 = vadd.f32 %v57, %v160
  %v162 = vpop.f32.mrb[0].mxu0
  %163 = vmatprep.mubr.f32.mxu0 0.0
  %164 = vmatmul.mubr.f32.gmra.mrb[0].mxu0 %v28
  %v165 = vpop.f32.mrb[0].mxu0
  %v166 = vadd.f32 %v57, %v165
  %v167 = vpop.f32.mrb[0].mxu0
  %168 = vmatprep.mubr.f32.mxu0 0.0
  %169 = vmatmul.mubr.f32.gmra.mrb[0].mxu0 %v29
  %v170 = vpop.f32.mrb[0].mxu0
  %v171 = vadd.f32 %v57, %v170
  %v172 = vpop.f32.mrb[0].mxu0
  %173 = vmatprep.mubr.f32.mxu0 0.0
  %174 = vmatmul.mubr.f32.gmra.mrb[0].mxu0 %v30
  %v175 = vpop.f32.mrb[0].mxu0
  %v176 = vadd.f32 %v57, %v175
  %v177 = vpop.f32.mrb[0].mxu0
  %178 = vmatprep.mubr.f32.mxu0 0.0
  %179 = vmatmul.mubr.f32.gmra.mrb[0].mxu0 %v31
  %v180 = vpop.f32.mrb[0].mxu0
  %v181 = vadd.f32 %v57, %v180
  %v182 = vpop.f32.mrb[0].mxu0
  %183 = vmatprep.mubr.f32.mxu0 0.0
  %184 = vmatmul.mubr.f32.gmra.mrb[0].mxu0 %v32
  %v185 = vpop.f32.mrb[0].mxu0
  %v186 = vadd.f32 %v57, %v185
  %v187 = vpop.f32.mrb[0].mxu0
  %188 = vmatprep.mubr.f32.mxu0 0.0
  %189 = vmatmul.mubr.f32.gmra.mrb[0].mxu0 %v33
  %v190 = vpop.f32.mrb[0].mxu0
  %v191 = vadd.f32 %v57, %v190
  %v192 = vpop.f32.mrb[0].mxu0
  %193 = vmatprep.mubr.f32.mxu0 0.0
  %194 = vmatmul.mubr.f32.gmra.mrb[0].mxu0 %v34
  %v195 = vpop.f32.mrb[0].mxu0
  %v196 = vadd.f32 %v57, %v195
  %v197 = vpop.f32.mrb[0].mxu0
  %198 = vmatprep.mubr.f32.mxu0 0.0
  %199 = vmatmul.mubr.f32.gmra.mrb[0].mxu0 %v35
  %v200 = vpop.f32.mrb[0].mxu0
  %v201 = vadd.f32 %v57, %v200
  %v202 = vpop.f32.mrb[0].mxu0
  %203 = vdwg.mxu0
  %v204 = vmax.f32 %v126, 0.0
  %v205 = vmax.f32 %v131, 0.0
  %v206 = vmax.f32 %v136, 0.0
  %v207 = vmax.f32 %v141, 0.0
  %v208 = vmax.f32 %v146, 0.0
  %v209 = vmax.f32 %v151, 0.0
  %v210 = vmax.f32 %v156, 0.0
  %v211 = vmax.f32 %v161, 0.0
  %v212 = vmax.f32 %v166, 0.0
  %v213 = vmax.f32 %v171, 0.0
  %v214 = vmax.f32 %v176, 0.0
  %v215 = vmax.f32 %v181, 0.0
  %v216 = vmax.f32 %v186, 0.0
  %v217 = vmax.f32 %v191, 0.0
  %v218 = vmax.f32 %v196, 0.0
  %v219 = vmax.f32 %v201, 0.0
  %v220 = vld [vmem:[%s3] sm:$0xff]
  %v221 = vld [vmem:[%s3 + $0x8] sm:$0xff]
  %v222 = vld [vmem:[%s3 + $0x10] sm:$0xff]
  %v223 = vld [vmem:[%s3 + $0x18] sm:$0xff]
  %v224 = vld [vmem:[%s3 + $0x20] sm:$0xff]
  %v225 = vld [vmem:[%s3 + $0x28] sm:$0xff]
  %v226 = vld [vmem:[%s3 + $0x30] sm:$0xff]
  %v227 = vld [vmem:[%s3 + $0x38] sm:$0xff]
  %v228 = vld [vmem:[%s3 + $0x40] sm:$0xff]
  %v229 = vld [vmem:[%s3 + $0x48] sm:$0xff]
  %v230 = vld [vmem:[%s3 + $0x50] sm:$0xff]
  %v231 = vld [vmem:[%s3 + $0x58] sm:$0xff]
  %v232 = vld [vmem:[%s3 + $0x60] sm:$0xff]
  %v233 = vld [vmem:[%s3 + $0x68] sm:$0xff]
  %v234 = vld [vmem:[%s3 + $0x70] sm:$0xff]
  %v235 = vld [vmem:[%s3 + $0x78] sm:$0xff]
  %v236 = vld [vmem:[%s4] sm:$0x1]
  %v238 = vlaneseq
  %v239 = vshrl.u32 %v238, 7
  %v240 = vsub.s32 0, %v239
  %v241 = vrot.slane %v236, %v240
  %243 = vmatprep.subr.mxu0 0.0
  %244 = vmatpush1.msra.mxu0 %v220
  %245 = vmatprep.subr.mxu0 0.0
  %246 = vmatpush1.msra.mxu0 %v221
  %247 = vmatprep.subr.mxu0 0.0
  %248 = vmatpush1.msra.mxu0 %v222
  %249 = vmatprep.subr.mxu0 0.0
  %250 = vmatpush1.msra.mxu0 %v223
  %251 = vmatprep.subr.mxu0 0.0
  %252 = vmatpush1.msra.mxu0 %v224
  %253 = vmatprep.subr.mxu0 0.0
  %254 = vmatpush1.msra.mxu0 %v225
  %255 = vmatprep.subr.mxu0 0.0
  %256 = vmatpush1.msra.mxu0 %v226
  %257 = vmatprep.subr.mxu0 0.0
  %258 = vmatpush1.msra.mxu0 %v227
  %259 = vmatprep.subr.mxu0 0.0
  %260 = vmatpush1.msra.mxu0 %v228
  %261 = vmatprep.subr.mxu0 0.0
  %262 = vmatpush1.msra.mxu0 %v229
  %263 = vmatprep.subr.mxu0 0.0
  %264 = vmatpush1.msra.mxu0 %v230
  %265 = vmatprep.subr.mxu0 0.0
  %266 = vmatpush1.msra.mxu0 %v231
  %267 = vmatprep.subr.mxu0 0.0
  %268 = vmatpush1.msra.mxu0 %v232
  %269 = vmatprep.subr.mxu0 0.0
  %270 = vmatpush1.msra.mxu0 %v233
  %271 = vmatprep.subr.mxu0 0.0
  %272 = vmatpush1.msra.mxu0 %v234
  %273 = vmatprep.subr.mxu0 0.0
  %274 = vmatpush1.msra.mxu0 %v235
  %275 = vmatprep.subr.mxu0 0.0
  %276 = vmatpush1.msra.mxu0 0.0
  %277 = vmatprep.subr.mxu0 0.0
  %278 = vmatpush1.msra.mxu0 0.0
  %279 = vmatprep.subr.mxu0 0.0
  %280 = vmatpush1.msra.mxu0 0.0
  %281 = vmatprep.subr.mxu0 0.0
  %282 = vmatpush1.msra.mxu0 0.0
  %283 = vmatprep.subr.mxu0 0.0
  %284 = vmatpush1.msra.mxu0 0.0
  %285 = vmatprep.subr.mxu0 0.0
  %286 = vmatpush1.msra.mxu0 0.0
  %287 = vmatprep.subr.mxu0 0.0
  %288 = vmatpush1.msra.mxu0 0.0
  %289 = vmatprep.subr.mxu0 0.0
  %290 = vmatpush1.msra.mxu0 0.0
  %291 = vmatprep.subr.mxu0 0.0
  %292 = vmatpush1.msra.mxu0 0.0
  %293 = vmatprep.subr.mxu0 0.0
  %294 = vmatpush1.msra.mxu0 0.0
  %295 = vmatprep.subr.mxu0 0.0
  %296 = vmatpush1.msra.mxu0 0.0
  %297 = vmatprep.subr.mxu0 0.0
  %298 = vmatpush1.msra.mxu0 0.0
  %299 = vmatprep.subr.mxu0 0.0
  %300 = vmatpush1.msra.mxu0 0.0
  %301 = vmatprep.subr.mxu0 0.0
  %302 = vmatpush1.msra.mxu0 0.0
  %303 = vmatprep.subr.mxu0 0.0
  %304 = vmatpush1.msra.mxu0 0.0
  %305 = vmatprep.subr.mxu0 0.0
  %306 = vmatpush1.msra.mxu0 0.0
  %307 = vmatprep.mubr.f32.mxu0 0.0
  %308 = vmatmul.mubr.f32.gmra.mrb[0].mxu0 %v204
  %v309 = vpop.f32.mrb[0].mxu0
  %v310 = vadd.f32 %v241, %v309
  %v311 = vpop.f32.mrb[0].mxu0
  %312 = vmatprep.mubr.f32.mxu0 0.0
  %313 = vmatmul.mubr.f32.gmra.mrb[0].mxu0 %v205
  %v314 = vpop.f32.mrb[0].mxu0
  %v315 = vadd.f32 %v241, %v314
  %v316 = vpop.f32.mrb[0].mxu0
  %317 = vmatprep.mubr.f32.mxu0 0.0
  %318 = vmatmul.mubr.f32.gmra.mrb[0].mxu0 %v206
  %v319 = vpop.f32.mrb[0].mxu0
  %v320 = vadd.f32 %v241, %v319
  %v321 = vpop.f32.mrb[0].mxu0
  %322 = vmatprep.mubr.f32.mxu0 0.0
  %323 = vmatmul.mubr.f32.gmra.mrb[0].mxu0 %v207
  %v324 = vpop.f32.mrb[0].mxu0
  %v325 = vadd.f32 %v241, %v324
  %v326 = vpop.f32.mrb[0].mxu0
  %327 = vmatprep.mubr.f32.mxu0 0.0
  %328 = vmatmul.mubr.f32.gmra.mrb[0].mxu0 %v208
  %v329 = vpop.f32.mrb[0].mxu0
  %v330 = vadd.f32 %v241, %v329
  %v331 = vpop.f32.mrb[0].mxu0
  %332 = vmatprep.mubr.f32.mxu0 0.0
  %333 = vmatmul.mubr.f32.gmra.mrb[0].mxu0 %v209
  %v334 = vpop.f32.mrb[0].mxu0
  %v335 = vadd.f32 %v241, %v334
  %v336 = vpop.f32.mrb[0].mxu0
  %337 = vmatprep.mubr.f32.mxu0 0.0
  %338 = vmatmul.mubr.f32.gmra.mrb[0].mxu0 %v210
  %v339 = vpop.f32.mrb[0].mxu0
  %v340 = vadd.f32 %v241, %v339
  %v341 = vpop.f32.mrb[0].mxu0
  %342 = vmatprep.mubr.f32.mxu0 0.0
  %343 = vmatmul.mubr.f32.gmra.mrb[0].mxu0 %v211
  %v344 = vpop.f32.mrb[0].mxu0
  %v345 = vadd.f32 %v241, %v344
  %v346 = vpop.f32.mrb[0].mxu0
  %347 = vmatprep.mubr.f32.mxu0 0.0
  %348 = vmatmul.mubr.f32.gmra.mrb[0].mxu0 %v212
  %v349 = vpop.f32.mrb[0].mxu0
  %v350 = vadd.f32 %v241, %v349
  %v351 = vpop.f32.mrb[0].mxu0
  %352 = vmatprep.mubr.f32.mxu0 0.0
  %353 = vmatmul.mubr.f32.gmra.mrb[0].mxu0 %v213
  %v354 = vpop.f32.mrb[0].mxu0
  %v355 = vadd.f32 %v241, %v354
  %v356 = vpop.f32.mrb[0].mxu0
  %357 = vmatprep.mubr.f32.mxu0 0.0
  %358 = vmatmul.mubr.f32.gmra.mrb[0].mxu0 %v214
  %v359 = vpop.f32.mrb[0].mxu0
  %v360 = vadd.f32 %v241, %v359
  %v361 = vpop.f32.mrb[0].mxu0
  %362 = vmatprep.mubr.f32.mxu0 0.0
  %363 = vmatmul.mubr.f32.gmra.mrb[0].mxu0 %v215
  %v364 = vpop.f32.mrb[0].mxu0
  %v365 = vadd.f32 %v241, %v364
  %v366 = vpop.f32.mrb[0].mxu0
  %367 = vmatprep.mubr.f32.mxu0 0.0
  %368 = vmatmul.mubr.f32.gmra.mrb[0].mxu0 %v216
  %v369 = vpop.f32.mrb[0].mxu0
  %v370 = vadd.f32 %v241, %v369
  %v371 = vpop.f32.mrb[0].mxu0
  %372 = vmatprep.mubr.f32.mxu0 0.0
  %373 = vmatmul.mubr.f32.gmra.mrb[0].mxu0 %v217
  %v374 = vpop.f32.mrb[0].mxu0
  %v375 = vadd.f32 %v241, %v374
  %v376 = vpop.f32.mrb[0].mxu0
  %377 = vmatprep.mubr.f32.mxu0 0.0
  %378 = vmatmul.mubr.f32.gmra.mrb[0].mxu0 %v218
  %v379 = vpop.f32.mrb[0].mxu0
  %v380 = vadd.f32 %v241, %v379
  %v381 = vpop.f32.mrb[0].mxu0
  %382 = vmatprep.mubr.f32.mxu0 0.0
  %383 = vmatmul.mubr.f32.gmra.mrb[0].mxu0 %v219
  %v384 = vpop.f32.mrb[0].mxu0
  %v385 = vadd.f32 %v241, %v384
  %v386 = vpop.f32.mrb[0].mxu0
  %387 = vdwg.mxu0
  %388 = vst [vmem:[%s5] sm:$0xff] %v310
  %389 = vst [vmem:[%s5 + $0x8] sm:$0xff] %v315
  %390 = vst [vmem:[%s5 + $0x10] sm:$0xff] %v320
  %391 = vst [vmem:[%s5 + $0x18] sm:$0xff] %v325
  %392 = vst [vmem:[%s5 + $0x20] sm:$0xff] %v330
  %393 = vst [vmem:[%s5 + $0x28] sm:$0xff] %v335
  %394 = vst [vmem:[%s5 + $0x30] sm:$0xff] %v340
  %395 = vst [vmem:[%s5 + $0x38] sm:$0xff] %v345
  %396 = vst [vmem:[%s5 + $0x40] sm:$0xff] %v350
  %397 = vst [vmem:[%s5 + $0x48] sm:$0xff] %v355
  %398 = vst [vmem:[%s5 + $0x50] sm:$0xff] %v360
  %399 = vst [vmem:[%s5 + $0x58] sm:$0xff] %v365
  %400 = vst [vmem:[%s5 + $0x60] sm:$0xff] %v370
  %401 = vst [vmem:[%s5 + $0x68] sm:$0xff] %v375
  %402 = vst [vmem:[%s5 + $0x70] sm:$0xff] %v380
  %403 = vst [vmem:[%s5 + $0x78] sm:$0xff] %v385
  // Predicated region
  $region22: #{_appnp_forward_padded.2} parent=0 // pred_check
    _
  $region23: #{_appnp_forward_padded.2} parent=0 // pred_check_branch
    %405 = sbr.rel (0) target = $region25
  $region24: #{_appnp_forward_padded.2} parent=0 // pred_region
    _
  $region25: #{_appnp_forward_padded.2} parent=0 // pred_fallthru
    _
  // Predicated region
  $region26: #{_appnp_forward_padded.2} parent=0 // pred_check
    _
  $region27: #{_appnp_forward_padded.2} parent=0 // pred_check_branch
    %407 = sbr.rel (0) target = $region29
  $region28: #{_appnp_forward_padded.2} parent=0 // pred_region
    _
  $region29: #{_appnp_forward_padded.2} parent=0 // pred_fallthru
    _

// kernel: _appnp_forward_padded.3
$region0: #{_appnp_forward_padded.3}
  #allocation0 [shape = 'u32[]', space=smem, size = 0x4, offset = 0x4, fixed_abs, tag = 'smem constant byte address 0x4 - core index']
  #allocation1 [shape = 'u32[144,128]{1,0:T(1,128)}', space=vmem, size = 0x12000, scoped, tag = 'internal scratch']
  %s0 = inlined_call_operand.vmem [shape: bf16[128,128], index: 0, kind: input, shape index: {}]
  %s1 = inlined_call_operand.vmem [shape: f32[128,128], index: 1, kind: input, shape index: {}]
  %s2 = inlined_call_operand.vmem [shape: f32[128,128], index: 2, kind: output, shape index: {}]
  %s3 = sld [smem:[#allocation0]]
  $region45: #{_appnp_forward_padded.3} parent=0
    _
  %s5 = ssub.s32 1, %s3
  %s6 = scalar_select 0, %s5, %s3
  loop: start=0, step=1, limit=12
  $region2: #{_appnp_forward_padded.3} parent=0 // loop_pre_header
    _
  $region3: #{_appnp_forward_padded.3} parent=0 // loop_header
    %s8 = sphi 0, %s12
    %p9 = scmp.ge.s32.totalorder %s8, 12
    %s16 = sphi 0, %s16
    %s18 = sphi 0, %s16
    %s19 = sphi 0, %s18
    %s33 = sphi 0, %s19
    %s37 = sphi 0, %s37
    %s39 = sphi 0, %s37
    %s40 = sphi 0, %s39
    %s54 = sphi 0, %s40
    %s58 = sphi 0, %s58
    %s60 = sphi 0, %s58
    %s61 = sphi 0, %s60
    %s75 = sphi 0, %s61
  $region4: #{_appnp_forward_padded.3} parent=0 // loop_header_branch
    %11 = sbr.rel (%p9) target = $region8
  $region5: #{_appnp_forward_padded.3} parent=0 // loop_body
    %s13 = ssub.s32 %s8, 1
    %s14 = ssub.s32 %s8, 2
    %s15 = sadd.s32 %s8, 1
    %s17 = sadd.s32 %s16, 1
    %p20 = scmp.eq.s32.totalorder %s8, 9
    %p21 = scmp.ne.s32.totalorder %s16, %s18
    %p22 = scmp.eq.s32.totalorder %s8, 0
    %p23 = por %p21, %p22
    %p24 = scmp.ne.s32.totalorder %s16, %s18
    %p25 = scmp.eq.s32.totalorder %s13, 9
    %p26 = por %p24, %p25
    %p27 = scmp.ne.s32.totalorder %s18, %s19
    %p28 = scmp.eq.s32.totalorder %s13, 0
    %p29 = por %p27, %p28
    %p30 = scmp.ne.s32.totalorder %s18, %s19
    %p31 = scmp.eq.s32.totalorder %s14, 9
    %p32 = por %p30, %p31
    %p34 = scmp.ne.s32.totalorder %s19, %s33
    %p35 = scmp.eq.s32.totalorder %s14, 0
    %p36 = por %p34, %p35
    %s38 = sadd.s32 %s37, 1
    %p41 = scmp.eq.s32.totalorder %s8, 9
    %p42 = scmp.ne.s32.totalorder %s37, %s39
    %p43 = scmp.eq.s32.totalorder %s8, 0
    %p44 = por %p42, %p43
    %p45 = scmp.ne.s32.totalorder %s37, %s39
    %p46 = scmp.eq.s32.totalorder %s13, 9
    %p47 = por %p45, %p46
    %p48 = scmp.ne.s32.totalorder %s39, %s40
    %p49 = scmp.eq.s32.totalorder %s13, 0
    %p50 = por %p48, %p49
    %p51 = scmp.ne.s32.totalorder %s39, %s40
    %p52 = scmp.eq.s32.totalorder %s14, 9
    %p53 = por %p51, %p52
    %p55 = scmp.ne.s32.totalorder %s40, %s54
    %p56 = scmp.eq.s32.totalorder %s14, 0
    %p57 = por %p55, %p56
    %s59 = sadd.s32 %s58, 1
    %p62 = scmp.eq.s32.totalorder %s8, 9
    %p63 = scmp.ne.s32.totalorder %s58, %s60
    %p64 = scmp.eq.s32.totalorder %s8, 0
    %p65 = por %p63, %p64
    %p66 = scmp.ne.s32.totalorder %s58, %s60
    %p67 = scmp.eq.s32.totalorder %s13, 9
    %p68 = por %p66, %p67
    %p69 = scmp.ne.s32.totalorder %s60, %s61
    %p70 = scmp.eq.s32.totalorder %s13, 0
    %p71 = por %p69, %p70
    %p72 = scmp.ne.s32.totalorder %s60, %s61
    %p73 = scmp.eq.s32.totalorder %s14, 9
    %p74 = por %p72, %p73
    %p76 = scmp.ne.s32.totalorder %s61, %s75
    %p77 = scmp.eq.s32.totalorder %s14, 0
    %p78 = por %p76, %p77
    %p79 = scmp.le.s32.totalorder 1, %s8
    %p80 = scmp.lt.s32.totalorder %s8, 11
    %p81 = pnand %p79, %p80
    %p82 = pneg %p81
    // Predicated region
    $region9: #{_appnp_forward_padded.3} parent=5 // pred_check
      _
    $region10: #{_appnp_forward_padded.3} parent=5 // pred_check_branch
      %84 = sbr.rel (%p81) target = $region12
    $region11: #{_appnp_forward_padded.3} parent=5 // pred_region
      %s85 = ssub.s32 %s8, 1
      // Predicated region
      $region13: #{_appnp_forward_padded.3} parent=11 // pred_check
        %p86 = pneg %p29
      $region14: #{_appnp_forward_padded.3} parent=11 // pred_check_branch
        %88 = sbr.rel (%p86) target = $region16
      $region15: #{_appnp_forward_padded.3} parent=11 // pred_region
        _
      $region16: #{_appnp_forward_padded.3} parent=11 // pred_fallthru
        _
      // Predicated region
      $region17: #{_appnp_forward_padded.3} parent=11 // pred_check
        %p89 = pneg %p50
      $region18: #{_appnp_forward_padded.3} parent=11 // pred_check_branch
        %91 = sbr.rel (%p89) target = $region20
      $region19: #{_appnp_forward_padded.3} parent=11 // pred_region
        _
      $region20: #{_appnp_forward_padded.3} parent=11 // pred_fallthru
        _
    $region12: #{_appnp_forward_padded.3} parent=5 // pred_fallthru
      _
    %p92 = scmp.lt.s32.totalorder %s8, 10
    // Predicated region
    $region21: #{_appnp_forward_padded.3} parent=5 // pred_check
      %p93 = pneg %p92
    $region22: #{_appnp_forward_padded.3} parent=5 // pred_check_branch
      %95 = sbr.rel (%p93) target = $region24
    $region23: #{_appnp_forward_padded.3} parent=5 // pred_region
      _
    $region24: #{_appnp_forward_padded.3} parent=5 // pred_fallthru
      _
    %p96 = scmp.le.s32.totalorder 1, %s8
    %p97 = scmp.lt.s32.totalorder %s8, 11
    %p98 = pnand %p96, %p97
    %p99 = pneg %p98
    // Predicated region
    $region25: #{_appnp_forward_padded.3} parent=5 // pred_check
      _
    $region26: #{_appnp_forward_padded.3} parent=5 // pred_check_branch
      %101 = sbr.rel (%p98) target = $region28
    $region27: #{_appnp_forward_padded.3} parent=5 // pred_region
      %s102 = ssub.s32 %s8, 1
      %p103 = pneg %p29
      %p104 = pneg %p26
      %p105 = pneg %p50
      %p106 = pneg %p47
      %p107 = pneg %p71
      %p108 = pneg %p68
      %v110 = vld [vmem:[%s1] sm:$0xff]
      %v111 = vld [vmem:[%s1 + $0x8] sm:$0xff]
      %v112 = vld [vmem:[%s1 + $0x10] sm:$0xff]
      %v113 = vld [vmem:[%s1 + $0x18] sm:$0xff]
      %v114 = vld [vmem:[%s1 + $0x20] sm:$0xff]
      %v115 = vld [vmem:[%s1 + $0x28] sm:$0xff]
      %v116 = vld [vmem:[%s1 + $0x30] sm:$0xff]
      %v117 = vld [vmem:[%s1 + $0x38] sm:$0xff]
      %v118 = vld [vmem:[%s1 + $0x40] sm:$0xff]
      %v119 = vld [vmem:[%s1 + $0x48] sm:$0xff]
      %v120 = vld [vmem:[%s1 + $0x50] sm:$0xff]
      %v121 = vld [vmem:[%s1 + $0x58] sm:$0xff]
      %v122 = vld [vmem:[%s1 + $0x60] sm:$0xff]
      %v123 = vld [vmem:[%s1 + $0x68] sm:$0xff]
      %v124 = vld [vmem:[%s1 + $0x70] sm:$0xff]
      %v125 = vld [vmem:[%s1 + $0x78] sm:$0xff]
      %p126 = scmp.eq.s32.totalorder %s13, 0
      // Predicated region
      $region29: #{_appnp_forward_padded.3} parent=27 // pred_check
        %p127 = pneg %p126
      $region30: #{_appnp_forward_padded.3} parent=27 // pred_check_branch
        %129 = sbr.rel (%p127) target = $region32
      $region31: #{_appnp_forward_padded.3} parent=27 // pred_region
        %130 = vst [vmem:[%s2] sm:$0xff] %v110
        %131 = vst [vmem:[%s2 + $0x8] sm:$0xff] %v111
        %132 = vst [vmem:[%s2 + $0x10] sm:$0xff] %v112
        %133 = vst [vmem:[%s2 + $0x18] sm:$0xff] %v113
        %134 = vst [vmem:[%s2 + $0x20] sm:$0xff] %v114
        %135 = vst [vmem:[%s2 + $0x28] sm:$0xff] %v115
        %136 = vst [vmem:[%s2 + $0x30] sm:$0xff] %v116
        %137 = vst [vmem:[%s2 + $0x38] sm:$0xff] %v117
        %138 = vst [vmem:[%s2 + $0x40] sm:$0xff] %v118
        %139 = vst [vmem:[%s2 + $0x48] sm:$0xff] %v119
        %140 = vst [vmem:[%s2 + $0x50] sm:$0xff] %v120
        %141 = vst [vmem:[%s2 + $0x58] sm:$0xff] %v121
        %142 = vst [vmem:[%s2 + $0x60] sm:$0xff] %v122
        %143 = vst [vmem:[%s2 + $0x68] sm:$0xff] %v123
        %144 = vst [vmem:[%s2 + $0x70] sm:$0xff] %v124
        %145 = vst [vmem:[%s2 + $0x78] sm:$0xff] %v125
      $region32: #{_appnp_forward_padded.3} parent=27 // pred_fallthru
        _
      %v146 = vld [vmem:[%s2] sm:$0xff]
      %v147 = vld [vmem:[%s2 + $0x8] sm:$0xff]
      %v148 = vld [vmem:[%s2 + $0x10] sm:$0xff]
      %v149 = vld [vmem:[%s2 + $0x18] sm:$0xff]
      %v150 = vld [vmem:[%s2 + $0x20] sm:$0xff]
      %v151 = vld [vmem:[%s2 + $0x28] sm:$0xff]
      %v152 = vld [vmem:[%s2 + $0x30] sm:$0xff]
      %v153 = vld [vmem:[%s2 + $0x38] sm:$0xff]
      %v154 = vld [vmem:[%s2 + $0x40] sm:$0xff]
      %v155 = vld [vmem:[%s2 + $0x48] sm:$0xff]
      %v156 = vld [vmem:[%s2 + $0x50] sm:$0xff]
      %v157 = vld [vmem:[%s2 + $0x58] sm:$0xff]
      %v158 = vld [vmem:[%s2 + $0x60] sm:$0xff]
      %v159 = vld [vmem:[%s2 + $0x68] sm:$0xff]
      %v160 = vld [vmem:[%s2 + $0x70] sm:$0xff]
      %v161 = vld [vmem:[%s2 + $0x78] sm:$0xff]
      %v162 = vld [vmem:[%s0] sm:$0xf]
      %v163 = vld [vmem:[%s0 + $0x4] sm:$0xf]
      %v164 = vld [vmem:[%s0 + $0x8] sm:$0xf]
      %v165 = vld [vmem:[%s0 + $0xc] sm:$0xf]
      %v166 = vld [vmem:[%s0 + $0x10] sm:$0xf]
      %v167 = vld [vmem:[%s0 + $0x14] sm:$0xf]
      %v168 = vld [vmem:[%s0 + $0x18] sm:$0xf]
      %v169 = vld [vmem:[%s0 + $0x1c] sm:$0xf]
      %v170 = vld [vmem:[%s0 + $0x20] sm:$0xf]
      %v171 = vld [vmem:[%s0 + $0x24] sm:$0xf]
      %v172 = vld [vmem:[%s0 + $0x28] sm:$0xf]
      %v173 = vld [vmem:[%s0 + $0x2c] sm:$0xf]
      %v174 = vld [vmem:[%s0 + $0x30] sm:$0xf]
      %v175 = vld [vmem:[%s0 + $0x34] sm:$0xf]
      %v176 = vld [vmem:[%s0 + $0x38] sm:$0xf]
      %v177 = vld [vmem:[%s0 + $0x3c] sm:$0xf]
      %v178 = vpack.c.bf16 %v147, %v146
      %v179 = vpack.c.bf16 %v149, %v148
      %v180 = vpack.c.bf16 %v151, %v150
      %v181 = vpack.c.bf16 %v153, %v152
      %v182 = vpack.c.bf16 %v155, %v154
      %v183 = vpack.c.bf16 %v157, %v156
      %v184 = vpack.c.bf16 %v159, %v158
      %v185 = vpack.c.bf16 %v161, %v160
      %v202 = vunpack.c.l.b16 %v162
      %v203 = vunpack.c.l.b16 %v163
      %v204 = vunpack.c.l.b16 %v164
      %v205 = vunpack.c.l.b16 %v165
      %v206 = vunpack.c.l.b16 %v166
      %v207 = vunpack.c.l.b16 %v167
      %v208 = vunpack.c.l.b16 %v168
      %v209 = vunpack.c.l.b16 %v169
      %v210 = vunpack.c.l.b16 %v170
      %v211 = vunpack.c.l.b16 %v171
      %v212 = vunpack.c.l.b16 %v172
      %v213 = vunpack.c.l.b16 %v173
      %v214 = vunpack.c.l.b16 %v174
      %v215 = vunpack.c.l.b16 %v175
      %v216 = vunpack.c.l.b16 %v176
      %v217 = vunpack.c.l.b16 %v177
      %v218 = vpack.c.b16 %v203, %v202
      %v219 = vpack.c.b16 %v205, %v204
      %v220 = vpack.c.b16 %v207, %v206
      %v221 = vpack.c.b16 %v209, %v208
      %v222 = vpack.c.b16 %v211, %v210
      %v223 = vpack.c.b16 %v213, %v212
      %v224 = vpack.c.b16 %v215, %v214
      %v225 = vpack.c.b16 %v217, %v216
      %234 = vmatprep.subr.bf16.mxu0 0
      %235 = vmatpush1.bf16.msra.mxu0 %v178
      %236 = vmatprep.subr.bf16.mxu0 0
      %237 = vmatpush1.bf16.msra.mxu0 %v179
      %238 = vmatprep.subr.bf16.mxu0 0
      %239 = vmatpush1.bf16.msra.mxu0 %v180
      %240 = vmatprep.subr.bf16.mxu0 0
      %241 = vmatpush1.bf16.msra.mxu0 %v181
      %242 = vmatprep.subr.bf16.mxu0 0
      %243 = vmatpush1.bf16.msra.mxu0 %v182
      %244 = vmatprep.subr.bf16.mxu0 0
      %245 = vmatpush1.bf16.msra.mxu0 %v183
      %246 = vmatprep.subr.bf16.mxu0 0
      %247 = vmatpush1.bf16.msra.mxu0 %v184
      %248 = vmatprep.subr.bf16.mxu0 0
      %249 = vmatpush1.bf16.msra.mxu0 %v185
      %250 = vmatprep.subr.bf16.mxu0 0
      %251 = vmatpush1.bf16.msra.mxu0 0
      %252 = vmatprep.subr.bf16.mxu0 0
      %253 = vmatpush1.bf16.msra.mxu0 0
      %254 = vmatprep.subr.bf16.mxu0 0
      %255 = vmatpush1.bf16.msra.mxu0 0
      %256 = vmatprep.subr.bf16.mxu0 0
      %257 = vmatpush1.bf16.msra.mxu0 0
      %258 = vmatprep.subr.bf16.mxu0 0
      %259 = vmatpush1.bf16.msra.mxu0 0
      %260 = vmatprep.subr.bf16.mxu0 0
      %261 = vmatpush1.bf16.msra.mxu0 0
      %262 = vmatprep.subr.bf16.mxu0 0
      %263 = vmatpush1.bf16.msra.mxu0 0
      %264 = vmatprep.subr.bf16.mxu0 0
      %265 = vmatpush1.bf16.msra.mxu0 0
      %266 = vmatprep.mubr.bf16.mxu0 0
      %267 = vmatmul.mubr.bf16.gmra.mrb[0].mxu0 %v218
      %v268 = vpop.f32.mrb[0].mxu0
      %v269 = vadd.f32 0.0, %v268
      %v270 = vpop.f32.mrb[0].mxu0
      %v271 = vpop.f32.mrb[0].mxu0
      %v272 = vadd.f32 0.0, %v271
      %v273 = vpop.f32.mrb[0].mxu0
      %274 = vmatprep.mubr.bf16.mxu0 0
      %275 = vmatmul.mubr.bf16.gmra.mrb[0].mxu0 %v219
      %v276 = vpop.f32.mrb[0].mxu0
      %v277 = vadd.f32 0.0, %v276
      %v278 = vpop.f32.mrb[0].mxu0
      %v279 = vpop.f32.mrb[0].mxu0
      %v280 = vadd.f32 0.0, %v279
      %v281 = vpop.f32.mrb[0].mxu0
      %282 = vmatprep.mubr.bf16.mxu0 0
      %283 = vmatmul.mubr.bf16.gmra.mrb[0].mxu0 %v220
      %v284 = vpop.f32.mrb[0].mxu0
      %v285 = vadd.f32 0.0, %v284
      %v286 = vpop.f32.mrb[0].mxu0
      %v287 = vpop.f32.mrb[0].mxu0
      %v288 = vadd.f32 0.0, %v287
      %v289 = vpop.f32.mrb[0].mxu0
      %290 = vmatprep.mubr.bf16.mxu0 0
      %291 = vmatmul.mubr.bf16.gmra.mrb[0].mxu0 %v221
      %v292 = vpop.f32.mrb[0].mxu0
      %v293 = vadd.f32 0.0, %v292
      %v294 = vpop.f32.mrb[0].mxu0
      %v295 = vpop.f32.mrb[0].mxu0
      %v296 = vadd.f32 0.0, %v295
      %v297 = vpop.f32.mrb[0].mxu0
      %298 = vmatprep.mubr.bf16.mxu0 0
      %299 = vmatmul.mubr.bf16.gmra.mrb[0].mxu0 %v222
      %v300 = vpop.f32.mrb[0].mxu0
      %v301 = vadd.f32 0.0, %v300
      %v302 = vpop.f32.mrb[0].mxu0
      %v303 = vpop.f32.mrb[0].mxu0
      %v304 = vadd.f32 0.0, %v303
      %v305 = vpop.f32.mrb[0].mxu0
      %306 = vmatprep.mubr.bf16.mxu0 0
      %307 = vmatmul.mubr.bf16.gmra.mrb[0].mxu0 %v223
      %v308 = vpop.f32.mrb[0].mxu0
      %v309 = vadd.f32 0.0, %v308
      %v310 = vpop.f32.mrb[0].mxu0
      %v311 = vpop.f32.mrb[0].mxu0
      %v312 = vadd.f32 0.0, %v311
      %v313 = vpop.f32.mrb[0].mxu0
      %314 = vmatprep.mubr.bf16.mxu0 0
      %315 = vmatmul.mubr.bf16.gmra.mrb[0].mxu0 %v224
      %v316 = vpop.f32.mrb[0].mxu0
      %v317 = vadd.f32 0.0, %v316
      %v318 = vpop.f32.mrb[0].mxu0
      %v319 = vpop.f32.mrb[0].mxu0
      %v320 = vadd.f32 0.0, %v319
      %v321 = vpop.f32.mrb[0].mxu0
      %322 = vmatprep.mubr.bf16.mxu0 0
      %323 = vmatmul.mubr.bf16.gmra.mrb[0].mxu0 %v225
      %v324 = vpop.f32.mrb[0].mxu0
      %v325 = vadd.f32 0.0, %v324
      %v326 = vpop.f32.mrb[0].mxu0
      %v327 = vpop.f32.mrb[0].mxu0
      %v328 = vadd.f32 0.0, %v327
      %v329 = vpop.f32.mrb[0].mxu0
      %330 = vdwg.mxu0
      %v331 = vmul.f32 %v269, 0.9
      %v332 = vmul.f32 %v272, 0.9
      %v333 = vmul.f32 %v277, 0.9
      %v334 = vmul.f32 %v280, 0.9
      %v335 = vmul.f32 %v285, 0.9
      %v336 = vmul.f32 %v288, 0.9
      %v337 = vmul.f32 %v293, 0.9
      %v338 = vmul.f32 %v296, 0.9
      %v339 = vmul.f32 %v301, 0.9
      %v340 = vmul.f32 %v304, 0.9
      %v341 = vmul.f32 %v309, 0.9
      %v342 = vmul.f32 %v312, 0.9
      %v343 = vmul.f32 %v317, 0.9
      %v344 = vmul.f32 %v320, 0.9
      %v345 = vmul.f32 %v325, 0.9
      %v346 = vmul.f32 %v328, 0.9
      %v347 = vmul.f32 %v110, 0.1
      %v348 = vmul.f32 %v111, 0.1
      %v349 = vmul.f32 %v112, 0.1
      %v350 = vmul.f32 %v113, 0.1
      %v351 = vmul.f32 %v114, 0.1
      %v352 = vmul.f32 %v115, 0.1
      %v353 = vmul.f32 %v116, 0.1
      %v354 = vmul.f32 %v117, 0.1
      %v355 = vmul.f32 %v118, 0.1
      %v356 = vmul.f32 %v119, 0.1
      %v357 = vmul.f32 %v120, 0.1
      %v358 = vmul.f32 %v121, 0.1
      %v359 = vmul.f32 %v122, 0.1
      %v360 = vmul.f32 %v123, 0.1
      %v361 = vmul.f32 %v124, 0.1
      %v362 = vmul.f32 %v125, 0.1
      %v363 = vadd.f32 %v331, %v347
      %v364 = vadd.f32 %v332, %v348
      %v365 = vadd.f32 %v333, %v349
      %v366 = vadd.f32 %v334, %v350
      %v367 = vadd.f32 %v335, %v351
      %v368 = vadd.f32 %v336, %v352
      %v369 = vadd.f32 %v337, %v353
      %v370 = vadd.f32 %v338, %v354
      %v371 = vadd.f32 %v339, %v355
      %v372 = vadd.f32 %v340, %v356
      %v373 = vadd.f32 %v341, %v357
      %v374 = vadd.f32 %v342, %v358
      %v375 = vadd.f32 %v343, %v359
      %v376 = vadd.f32 %v344, %v360
      %v377 = vadd.f32 %v345, %v361
      %v378 = vadd.f32 %v346, %v362
      %379 = vst [vmem:[%s2] sm:$0xff] %v363
      %380 = vst [vmem:[%s2 + $0x8] sm:$0xff] %v364
      %381 = vst [vmem:[%s2 + $0x10] sm:$0xff] %v365
      %382 = vst [vmem:[%s2 + $0x18] sm:$0xff] %v366
      %383 = vst [vmem:[%s2 + $0x20] sm:$0xff] %v367
      %384 = vst [vmem:[%s2 + $0x28] sm:$0xff] %v368
      %385 = vst [vmem:[%s2 + $0x30] sm:$0xff] %v369
      %386 = vst [vmem:[%s2 + $0x38] sm:$0xff] %v370
      %387 = vst [vmem:[%s2 + $0x40] sm:$0xff] %v371
      %388 = vst [vmem:[%s2 + $0x48] sm:$0xff] %v372
      %389 = vst [vmem:[%s2 + $0x50] sm:$0xff] %v373
      %390 = vst [vmem:[%s2 + $0x58] sm:$0xff] %v374
      %391 = vst [vmem:[%s2 + $0x60] sm:$0xff] %v375
      %392 = vst [vmem:[%s2 + $0x68] sm:$0xff] %v376
      %393 = vst [vmem:[%s2 + $0x70] sm:$0xff] %v377
      %394 = vst [vmem:[%s2 + $0x78] sm:$0xff] %v378
      // Predicated region
      $region33: #{_appnp_forward_padded.3} parent=27 // pred_check
        %p395 = pneg %p68
      $region34: #{_appnp_forward_padded.3} parent=27 // pred_check_branch
        %397 = sbr.rel (%p395) target = $region36
      $region35: #{_appnp_forward_padded.3} parent=27 // pred_region
        _
      $region36: #{_appnp_forward_padded.3} parent=27 // pred_fallthru
        _
      // Predicated region
      $region37: #{_appnp_forward_padded.3} parent=27 // pred_check
        %p398 = pneg %p68
      $region38: #{_appnp_forward_padded.3} parent=27 // pred_check_branch
        %400 = sbr.rel (%p398) target = $region40
      $region39: #{_appnp_forward_padded.3} parent=27 // pred_region
        _
      $region40: #{_appnp_forward_padded.3} parent=27 // pred_fallthru
        _
    $region28: #{_appnp_forward_padded.3} parent=5 // pred_fallthru
      _
    %p401 = scmp.le.s32.totalorder 2, %s8
    // Predicated region
    $region41: #{_appnp_forward_padded.3} parent=5 // pred_check
      %p402 = pneg %p401
    $region42: #{_appnp_forward_padded.3} parent=5 // pred_check_branch
      %404 = sbr.rel (%p402) target = $region44
    $region43: #{_appnp_forward_padded.3} parent=5 // pred_region
      %s405 = ssub.s32 %s8, 2
    $region44: #{_appnp_forward_padded.3} parent=5 // pred_fallthru
      _
  $region6: #{_appnp_forward_padded.3} parent=0 // loop_footer
    %s12 = sadd.s32 1, %s8
  $region7: #{_appnp_forward_padded.3} parent=0 // loop_footer_branch
    %7 = sbr.rel target = $region3
  $region8: #{_appnp_forward_padded.3} parent=0 // loop_exit
    _

</llo_original>
